<compile_context>
chip_gen: v6e
topology: v6e:2x2x1
jax: 0.10.0
libtpu: 0.0.40
codegen_flags: <defaults>
</compile_context>

<pallas_src>
import math
import jax
import jax.numpy as jnp
from jax import lax
from jax.experimental import pallas as pl
from jax.experimental.pallas import tpu as pltpu

# ---------------- model dimensions (small, consistent with the forward) ----------------
B = 2          # batch
S = 8          # sequence length (power of 2 -> batch/pos indices via shift/and)
BS = B * S
H = 32         # hidden size (stands in for 768)
F = 64         # FFN intermediate size
C = 3          # num_classes
VOCAB = 32
N_SEG = 2
LANES = 128    # lane-dense padding width for classifier / output
NEG_INF = -1e9
LN_EPS = 1e-12
S_LOG2 = 3
assert (1 << S_LOG2) == S

# lane-aligned column offsets inside the single packed bf16 weight slab (H rows, W_LANES cols)
_WQKV_OFF = 0      # (H, 3H)  fused Q/K/V
_WO_OFF = 128      # (H, H)
_W1_OFF = 256      # (H, F)
_W2T_OFF = 384     # (H, F)   == w2^T  (stored transposed so the slab keeps H rows)
_WP_OFF = 512      # (H, H)   pooler
_WC_OFF = 640      # (H, 128) classifier, zero-padded past C
W_LANES = 768


def _layernorm(x, g, b):
    mu = jnp.mean(x, axis=-1, keepdims=True)
    var = jnp.mean((x - mu) ** 2, axis=-1, keepdims=True)
    return (x - mu) * lax.rsqrt(var + LN_EPS) * g + b


def bert_cls_kernel(valid_ref,   # SMEM (B,) int32
                    x_ref,       # VMEM (B*S, H) f32 embedded tokens
                    w_ref,       # VMEM (H, W_LANES) bf16 packed weight slab
                    bias_ref,    # VMEM (16, 128) f32 packed bias / LN slab
                    out_ref):    # VMEM (B*S, 128) f32 lane-dense per-row logits
    f32 = jnp.float32
    bf16 = jnp.bfloat16

    x = x_ref[...]                                    # (BS, H) f32

    # --- packed bias / LayerNorm slab (f32) ---
    b_qkv = bias_ref[0:1, 0:3 * H]
    bo = bias_ref[1:2, 0:H]
    ln1g = bias_ref[2:3, 0:H]
    ln1b = bias_ref[3:4, 0:H]
    b1 = bias_ref[4:5, 0:F]
    b2 = bias_ref[5:6, 0:H]
    ln2g = bias_ref[6:7, 0:H]
    ln2b = bias_ref[7:8, 0:H]
    bp = bias_ref[8:9, 0:H]
    bc = bias_ref[9:10, :]                            # full 128 (zero past C)

    # --- packed weight slab (bf16, every sub-weight lane-aligned to 128) ---
    wqkv = w_ref[:, _WQKV_OFF:_WQKV_OFF + 3 * H]      # (H, 3H)
    wo = w_ref[:, _WO_OFF:_WO_OFF + H]                # (H, H)
    w1 = w_ref[:, _W1_OFF:_W1_OFF + F]                # (H, F)
    w2t = w_ref[:, _W2T_OFF:_W2T_OFF + F]             # (H, F) = w2^T
    wp = w_ref[:, _WP_OFF:_WP_OFF + H]                # (H, H)
    wc = w_ref[:, _WC_OFF:_WC_OFF + LANES]            # (H, 128)

    # --- fused Q/K/V projection: one (BS, H) x (H, 3H) bf16 MXU matmul ---
    qkv = jnp.dot(x.astype(bf16), wqkv, preferred_element_type=f32) + b_qkv
    q = qkv[:, 0:H]
    k = qkv[:, H:2 * H]
    v = qkv[:, 2 * H:3 * H]

    # --- batched single-head self-attention over ALL B*S rows at once ---
    # gen_attention_mask: key positions >= valid_length are masked out; combined with a
    # block-diagonal mask (queries of batch i only see keys of batch i), built from iotas.
    # NOTE: scale is 1/sqrt(H) (single-head stand-in), not 1/sqrt(head_dim) as in real BERT.
    scale = 1.0 / math.sqrt(H)
    scores = lax.dot_general(                          # (BS, BS), no explicit transpose
        q.astype(bf16), k.astype(bf16),
        dimension_numbers=(((1,), (1,)), ((), ())),
        preferred_element_type=f32) * scale

    r = lax.broadcasted_iota(jnp.int32, (BS, BS), 0)   # query row index
    c = lax.broadcasted_iota(jnp.int32, (BS, BS), 1)   # key column index
    q_batch = jnp.right_shift(r, S_LOG2)
    k_batch = jnp.right_shift(c, S_LOG2)
    k_pos = jnp.bitwise_and(c, S - 1)
    key_valid = jnp.full((BS, BS), valid_ref[0], dtype=jnp.int32)
    for bi in range(1, B):                             # B is tiny & static: trace-time unroll
        key_valid = jnp.where(k_batch == bi, valid_ref[bi], key_valid)
    keep = jnp.logical_and(q_batch == k_batch, k_pos < key_valid)
    scores = scores + jnp.where(keep, 0.0, NEG_INF)

    m = jnp.max(scores, axis=-1, keepdims=True)
    p = jnp.exp(scores - m)
    probs = p / jnp.sum(p, axis=-1, keepdims=True)     # exact softmax (matches torch)
    ctx = jnp.dot(probs.astype(bf16), v.astype(bf16), preferred_element_type=f32)  # (BS, H)

    attn_out = jnp.dot(ctx.astype(bf16), wo, preferred_element_type=f32) + bo
    h = _layernorm(x + attn_out, ln1g, ln1b)

    # --- feed-forward ---
    ff = jnp.dot(h.astype(bf16), w1, preferred_element_type=f32) + b1
    ff = jax.nn.gelu(ff, approximate=True)
    # TODO(synk): tanh-approx GELU; PyTorch nn.GELU default is exact erf GELU (tiny numeric delta).
    ff = lax.dot_general(                              # ff @ w2, with w2 stored transposed
        ff.astype(bf16), w2t,
        dimension_numbers=(((1,), (1,)), ((), ())),
        preferred_element_type=f32) + b2
    h2 = _layernorm(h + ff, ln2g, ln2b)

    # --- pooler + classifier evaluated on EVERY row (no CLS-selection matmul needed);
    #     the wrapper strides out the CLS rows 0 and S from the lane-dense output. ---
    pooled = jnp.tanh(jnp.dot(h2.astype(bf16), wp, preferred_element_type=f32) + bp)
    # TODO(synk): nn.Dropout(p=dr_rate) is identity in eval mode; training-mode dropout not reproduced.
    logits = jnp.dot(pooled.astype(bf16), wc, preferred_element_type=f32) + bc
    out_ref[...] = logits                              # full (BS, 128) unmasked lane-dense store


def init_params(key):
    ks = jax.random.split(key, 24)

    def w(k, shape, scale=0.05):
        return jax.random.normal(k, shape, dtype=jnp.float32) * scale

    p = {
        "tok_emb": w(ks[0], (VOCAB, H)),
        "seg_emb": w(ks[1], (N_SEG, H)),
        "pos_emb": w(ks[2], (S, H)),
        "emb_ln_g": jnp.ones((1, H), jnp.float32),
        "emb_ln_b": jnp.zeros((1, H), jnp.float32),
        "wq": w(ks[3], (H, H)), "bq": w(ks[4], (1, H)),
        "wk": w(ks[5], (H, H)), "bk": w(ks[6], (1, H)),
        "wv": w(ks[7], (H, H)), "bv": w(ks[8], (1, H)),
        "wo": w(ks[9], (H, H)), "bo": w(ks[10], (1, H)),
        "ln1g": jnp.ones((1, H), jnp.float32), "ln1b": jnp.zeros((1, H), jnp.float32),
        "w1": w(ks[11], (H, F)), "b1": w(ks[12], (1, F)),
        "w2": w(ks[13], (F, H)), "b2": w(ks[14], (1, H)),
        "ln2g": jnp.ones((1, H), jnp.float32), "ln2b": jnp.zeros((1, H), jnp.float32),
        "wp": w(ks[15], (H, H)), "bp": w(ks[16], (1, H)),
        "wc": w(ks[17], (H, C)), "bc": w(ks[18], (1, C)),
    }
    return p


def bert_classifier_yes_forward(token_ids, valid_length, segment_ids, params):
    """Equivalent of BERTClassifier_yes.forward (eval mode)."""
    # --- glue: embedding lookup + embedding layernorm (gather stays in plain JAX) ---
    x = (params["tok_emb"][token_ids]
         + params["seg_emb"][segment_ids]
         + params["pos_emb"][None, :, :])
    x = _layernorm(x, params["emb_ln_g"][None], params["emb_ln_b"][None])
    x2d = x.reshape(BS, H).astype(jnp.float32)

    # --- fuse QKV weights / biases ---
    wqkv = jnp.concatenate([params["wq"], params["wk"], params["wv"]], axis=1)   # (H, 3H)
    b_qkv = jnp.concatenate([params["bq"], params["bk"], params["bv"]], axis=1)  # (1, 3H)

    # --- lane-pad the classifier to 128 for a dense store ---
    wc_pad = jnp.zeros((H, LANES), jnp.float32).at[:, :C].set(params["wc"])
    bc_pad = jnp.zeros((1, LANES), jnp.float32).at[:, :C].set(params["bc"])

    # --- pack ALL weight matrices into one lane-aligned bf16 slab (single DMA) ---
    w_slab = jnp.zeros((H, W_LANES), jnp.float32)
    w_slab = w_slab.at[:, _WQKV_OFF:_WQKV_OFF + 3 * H].set(wqkv)
    w_slab = w_slab.at[:, _WO_OFF:_WO_OFF + H].set(params["wo"])
    w_slab = w_slab.at[:, _W1_OFF:_W1_OFF + F].set(params["w1"])
    w_slab = w_slab.at[:, _W2T_OFF:_W2T_OFF + F].set(params["w2"].T)
    w_slab = w_slab.at[:, _WP_OFF:_WP_OFF + H].set(params["wp"])
    w_slab = w_slab.at[:, _WC_OFF:_WC_OFF + LANES].set(wc_pad)
    w_slab = w_slab.astype(jnp.bfloat16)

    # --- pack all small bias / LN vectors into one (16, 128) f32 slab (single DMA) ---
    bias_rows = [
        b_qkv,                                    # row 0: fused qkv bias (3H)
        params["bo"],                             # row 1
        params["ln1g"], params["ln1b"],           # rows 2, 3
        params["b1"], params["b2"],               # rows 4, 5
        params["ln2g"], params["ln2b"],           # rows 6, 7
        params["bp"],                             # row 8
        bc_pad,                                   # row 9 (full 128)
    ]
    bias_slab = jnp.zeros((16, LANES), jnp.float32)
    for i, row in enumerate(bias_rows):
        bias_slab = bias_slab.at[i, : row.shape[1]].set(row[0])

    vmem = pl.BlockSpec(memory_space=pltpu.MemorySpace.VMEM)
    smem = pl.BlockSpec(memory_space=pltpu.MemorySpace.SMEM)

    cost = pl.CostEstimate(
        flops=460_000,            # ~sum of the 8 MXU matmuls
        transcendentals=2_048,    # exp + gelu(tanh) + tanh + rsqrt
        bytes_accessed=68_000,    # x + weight slab + bias slab + output + scalars
    )

    out = pl.pallas_call(
        bert_cls_kernel,
        out_shape=jax.ShapeDtypeStruct((BS, LANES), jnp.float32),
        in_specs=[smem, vmem, vmem, vmem],
        out_specs=vmem,
        cost_estimate=cost,
    )(valid_length.astype(jnp.int32), x2d, w_slab, bias_slab)

    # CLS rows sit at strided offsets 0 and S; only first C lanes are real logits.
    return out[::S, :C]


if __name__ == "__main__":
    key = jax.random.PRNGKey(0)
    k_tok, k_param = jax.random.split(key)

    token_ids = jax.random.randint(k_tok, (B, S), 0, VOCAB, dtype=jnp.int32)
    valid_length = jnp.array([5, 8], dtype=jnp.int32)
    segment_ids = jnp.zeros((B, S), dtype=jnp.int32)

    params = init_params(k_param)

    logits = bert_classifier_yes_forward(token_ids, valid_length, segment_ids, params)
    jax.block_until_ready(logits)
    assert logits.shape == (B, C) and logits.dtype == jnp.float32
    assert bool(jnp.all(jnp.isfinite(logits)))
    print("KERNEL_OK")
</pallas_src>

<mosaic_0001>
module attributes {stable_mosaic.version = 11 : i64} {
  func.func @bert_cls_kernel(%arg0: memref<2xi32, #tpu.memory_space<smem>>, %arg1: memref<16x32xf32, #tpu.memory_space<vmem>>, %arg2: memref<32x768xbf16, #tpu.memory_space<vmem>>, %arg3: memref<16x128xf32, #tpu.memory_space<vmem>>, %arg4: memref<16x128xf32, #tpu.memory_space<vmem>>) attributes {dimension_semantics = [], scalar_prefetch = 0 : i64, scratch_operands = 0 : i64, tpu.core_type = #tpu.core_type<tc>} {
    %c0 = arith.constant 0 : index
    %c0_0 = arith.constant 0 : index
    %0 = vector.load %arg1[%c0, %c0_0] : memref<16x32xf32, #tpu.memory_space<vmem>>, vector<16x32xf32>
    %c0_1 = arith.constant 0 : index
    %c0_2 = arith.constant 0 : index
    %1 = vector.load %arg3[%c0_1, %c0_2] : memref<16x128xf32, #tpu.memory_space<vmem>>, vector<1x96xf32>
    %c1 = arith.constant 1 : index
    %c0_3 = arith.constant 0 : index
    %2 = vector.load %arg3[%c1, %c0_3] : memref<16x128xf32, #tpu.memory_space<vmem>>, vector<1x32xf32>
    %c2 = arith.constant 2 : index
    %c0_4 = arith.constant 0 : index
    %3 = vector.load %arg3[%c2, %c0_4] : memref<16x128xf32, #tpu.memory_space<vmem>>, vector<1x32xf32>
    %c3 = arith.constant 3 : index
    %c0_5 = arith.constant 0 : index
    %4 = vector.load %arg3[%c3, %c0_5] : memref<16x128xf32, #tpu.memory_space<vmem>>, vector<1x32xf32>
    %c4 = arith.constant 4 : index
    %c0_6 = arith.constant 0 : index
    %5 = vector.load %arg3[%c4, %c0_6] : memref<16x128xf32, #tpu.memory_space<vmem>>, vector<1x64xf32>
    %c5 = arith.constant 5 : index
    %c0_7 = arith.constant 0 : index
    %6 = vector.load %arg3[%c5, %c0_7] : memref<16x128xf32, #tpu.memory_space<vmem>>, vector<1x32xf32>
    %c6 = arith.constant 6 : index
    %c0_8 = arith.constant 0 : index
    %7 = vector.load %arg3[%c6, %c0_8] : memref<16x128xf32, #tpu.memory_space<vmem>>, vector<1x32xf32>
    %c7 = arith.constant 7 : index
    %c0_9 = arith.constant 0 : index
    %8 = vector.load %arg3[%c7, %c0_9] : memref<16x128xf32, #tpu.memory_space<vmem>>, vector<1x32xf32>
    %c8 = arith.constant 8 : index
    %c0_10 = arith.constant 0 : index
    %9 = vector.load %arg3[%c8, %c0_10] : memref<16x128xf32, #tpu.memory_space<vmem>>, vector<1x32xf32>
    %c9 = arith.constant 9 : index
    %c0_11 = arith.constant 0 : index
    %10 = vector.load %arg3[%c9, %c0_11] : memref<16x128xf32, #tpu.memory_space<vmem>>, vector<1x128xf32>
    %c0_12 = arith.constant 0 : index
    %c0_13 = arith.constant 0 : index
    %11 = vector.load %arg2[%c0_12, %c0_13] : memref<32x768xbf16, #tpu.memory_space<vmem>>, vector<32x96xbf16>
    %c0_14 = arith.constant 0 : index
    %c128 = arith.constant 128 : index
    %12 = vector.load %arg2[%c0_14, %c128] : memref<32x768xbf16, #tpu.memory_space<vmem>>, vector<32x32xbf16>
    %c0_15 = arith.constant 0 : index
    %c256 = arith.constant 256 : index
    %13 = vector.load %arg2[%c0_15, %c256] : memref<32x768xbf16, #tpu.memory_space<vmem>>, vector<32x64xbf16>
    %c0_16 = arith.constant 0 : index
    %c384 = arith.constant 384 : index
    %14 = vector.load %arg2[%c0_16, %c384] : memref<32x768xbf16, #tpu.memory_space<vmem>>, vector<32x64xbf16>
    %c0_17 = arith.constant 0 : index
    %c512 = arith.constant 512 : index
    %15 = vector.load %arg2[%c0_17, %c512] : memref<32x768xbf16, #tpu.memory_space<vmem>>, vector<32x32xbf16>
    %c0_18 = arith.constant 0 : index
    %c640 = arith.constant 640 : index
    %16 = vector.load %arg2[%c0_18, %c640] : memref<32x768xbf16, #tpu.memory_space<vmem>>, vector<32x128xbf16>
    %17 = arith.truncf %0 : vector<16x32xf32> to vector<16x32xbf16>
    %cst = arith.constant dense<0.000000e+00> : vector<16x96xf32>
    %18 = tpu.matmul %17, %11, %cst {dimension_numbers = #tpu.dot_dimension_numbers<[1], [0], [0], [1], [0, 0, 1, 1], [], []>} : vector<16x32xbf16>, vector<32x96xbf16>, vector<16x96xf32> -> vector<16x96xf32>
    %19 = vector.broadcast %1 : vector<1x96xf32> to vector<16x96xf32>
    %20 = arith.addf %18, %19 : vector<16x96xf32>
    %21 = vector.extract_strided_slice %20 {offsets = [0, 0], sizes = [16, 32], strides = [1, 1]} : vector<16x96xf32> to vector<16x32xf32>
    %22 = vector.extract_strided_slice %20 {offsets = [0, 32], sizes = [16, 32], strides = [1, 1]} : vector<16x96xf32> to vector<16x32xf32>
    %23 = vector.extract_strided_slice %20 {offsets = [0, 64], sizes = [16, 32], strides = [1, 1]} : vector<16x96xf32> to vector<16x32xf32>
    %24 = arith.truncf %21 : vector<16x32xf32> to vector<16x32xbf16>
    %25 = arith.truncf %22 : vector<16x32xf32> to vector<16x32xbf16>
    %cst_19 = arith.constant dense<0.000000e+00> : vector<16x16xf32>
    %26 = tpu.matmul %24, %25, %cst_19 {dimension_numbers = #tpu.dot_dimension_numbers<[1], [1], [0], [0], [0, 0, 1, 0], [], []>} : vector<16x32xbf16>, vector<16x32xbf16>, vector<16x16xf32> -> vector<16x16xf32>
    %cst_20 = arith.constant 0.176776692 : f32
    %27 = vector.broadcast %cst_20 : f32 to vector<16x16xf32>
    %28 = arith.mulf %26, %27 : vector<16x16xf32>
    %29 = tpu.iota {dimensions = array<i32: 0>} : vector<16x16xi32>
    %30 = tpu.iota {dimensions = array<i32: 1>} : vector<16x16xi32>
    %c3_i32 = arith.constant 3 : i32
    %31 = vector.broadcast %c3_i32 : i32 to vector<16x16xi32>
    %32 = arith.shrsi %29, %31 : vector<16x16xi32>
    %c3_i32_21 = arith.constant 3 : i32
    %33 = vector.broadcast %c3_i32_21 : i32 to vector<16x16xi32>
    %34 = arith.shrsi %30, %33 : vector<16x16xi32>
    %c7_i32 = arith.constant 7 : i32
    %35 = vector.broadcast %c7_i32 : i32 to vector<16x16xi32>
    %36 = arith.andi %30, %35 : vector<16x16xi32>
    %c0_22 = arith.constant 0 : index
    %37 = memref.load %arg0[%c0_22] : memref<2xi32, #tpu.memory_space<smem>>
    %38 = vector.broadcast %37 : i32 to vector<16x16xi32>
    %c1_i32 = arith.constant 1 : i32
    %39 = vector.broadcast %c1_i32 : i32 to vector<16x16xi32>
    %40 = arith.cmpi eq, %34, %39 : vector<16x16xi32>
    %c1_23 = arith.constant 1 : index
    %41 = memref.load %arg0[%c1_23] : memref<2xi32, #tpu.memory_space<smem>>
    %42 = vector.broadcast %41 : i32 to vector<16x16xi32>
    %43 = arith.select %40, %42, %38 : vector<16x16xi1>, vector<16x16xi32>
    %44 = arith.cmpi eq, %32, %34 : vector<16x16xi32>
    %45 = arith.cmpi slt, %36, %43 : vector<16x16xi32>
    %46 = arith.andi %44, %45 : vector<16x16xi1>
    %cst_24 = arith.constant 0.000000e+00 : f32
    %cst_25 = arith.constant -1.000000e+09 : f32
    %47 = vector.broadcast %cst_24 : f32 to vector<16x16xf32>
    %48 = vector.broadcast %cst_25 : f32 to vector<16x16xf32>
    %49 = arith.select %46, %47, %48 : vector<16x16xi1>, vector<16x16xf32>
    %50 = arith.addf %28, %49 : vector<16x16xf32>
    %cst_26 = arith.constant dense<0xFF800000> : vector<16xf32>
    %51 = vector.multi_reduction <maximumf>, %50, %cst_26 [1] : vector<16x16xf32> to vector<16xf32>
    %52 = vector.shape_cast %51 : vector<16xf32> to vector<16x1xf32>
    %53 = vector.broadcast %52 : vector<16x1xf32> to vector<16x16xf32>
    %54 = arith.subf %50, %53 : vector<16x16xf32>
    %55 = math.exp %54 : vector<16x16xf32>
    %cst_27 = arith.constant dense<0.000000e+00> : vector<16xf32>
    %56 = vector.multi_reduction <add>, %55, %cst_27 [1] : vector<16x16xf32> to vector<16xf32>
    %57 = vector.shape_cast %56 : vector<16xf32> to vector<16x1xf32>
    %58 = vector.broadcast %57 : vector<16x1xf32> to vector<16x16xf32>
    %59 = arith.divf %55, %58 : vector<16x16xf32>
    %60 = arith.truncf %59 : vector<16x16xf32> to vector<16x16xbf16>
    %61 = arith.truncf %23 : vector<16x32xf32> to vector<16x32xbf16>
    %cst_28 = arith.constant dense<0.000000e+00> : vector<16x32xf32>
    %62 = tpu.matmul %60, %61, %cst_28 {dimension_numbers = #tpu.dot_dimension_numbers<[1], [0], [0], [1], [0, 0, 1, 1], [], []>} : vector<16x16xbf16>, vector<16x32xbf16>, vector<16x32xf32> -> vector<16x32xf32>
    %63 = arith.truncf %62 : vector<16x32xf32> to vector<16x32xbf16>
    %cst_29 = arith.constant dense<0.000000e+00> : vector<16x32xf32>
    %64 = tpu.matmul %63, %12, %cst_29 {dimension_numbers = #tpu.dot_dimension_numbers<[1], [0], [0], [1], [0, 0, 1, 1], [], []>} : vector<16x32xbf16>, vector<32x32xbf16>, vector<16x32xf32> -> vector<16x32xf32>
    %65 = vector.broadcast %2 : vector<1x32xf32> to vector<16x32xf32>
    %66 = arith.addf %64, %65 : vector<16x32xf32>
    %67 = arith.addf %0, %66 : vector<16x32xf32>
    %cst_30 = arith.constant dense<0.000000e+00> : vector<16xf32>
    %68 = vector.multi_reduction <add>, %67, %cst_30 [1] : vector<16x32xf32> to vector<16xf32>
    %69 = vector.shape_cast %68 : vector<16xf32> to vector<16x1xf32>
    %cst_31 = arith.constant 3.200000e+01 : f32
    %70 = vector.broadcast %cst_31 : f32 to vector<16x1xf32>
    %71 = arith.divf %69, %70 : vector<16x1xf32>
    %72 = vector.broadcast %71 : vector<16x1xf32> to vector<16x32xf32>
    %73 = arith.subf %67, %72 : vector<16x32xf32>
    %74 = arith.mulf %73, %73 : vector<16x32xf32>
    %cst_32 = arith.constant dense<0.000000e+00> : vector<16xf32>
    %75 = vector.multi_reduction <add>, %74, %cst_32 [1] : vector<16x32xf32> to vector<16xf32>
    %76 = vector.shape_cast %75 : vector<16xf32> to vector<16x1xf32>
    %cst_33 = arith.constant 3.200000e+01 : f32
    %77 = vector.broadcast %cst_33 : f32 to vector<16x1xf32>
    %78 = arith.divf %76, %77 : vector<16x1xf32>
    %79 = vector.broadcast %71 : vector<16x1xf32> to vector<16x32xf32>
    %80 = arith.subf %67, %79 : vector<16x32xf32>
    %cst_34 = arith.constant 9.99999996E-13 : f32
    %81 = vector.broadcast %cst_34 : f32 to vector<16x1xf32>
    %82 = arith.addf %78, %81 : vector<16x1xf32>
    %83 = math.rsqrt %82 : vector<16x1xf32>
    %84 = vector.broadcast %83 : vector<16x1xf32> to vector<16x32xf32>
    %85 = arith.mulf %80, %84 : vector<16x32xf32>
    %86 = vector.broadcast %3 : vector<1x32xf32> to vector<16x32xf32>
    %87 = arith.mulf %85, %86 : vector<16x32xf32>
    %88 = vector.broadcast %4 : vector<1x32xf32> to vector<16x32xf32>
    %89 = arith.addf %87, %88 : vector<16x32xf32>
    %90 = arith.truncf %89 : vector<16x32xf32> to vector<16x32xbf16>
    %cst_35 = arith.constant dense<0.000000e+00> : vector<16x64xf32>
    %91 = tpu.matmul %90, %13, %cst_35 {dimension_numbers = #tpu.dot_dimension_numbers<[1], [0], [0], [1], [0, 0, 1, 1], [], []>} : vector<16x32xbf16>, vector<32x64xbf16>, vector<16x64xf32> -> vector<16x64xf32>
    %92 = vector.broadcast %5 : vector<1x64xf32> to vector<16x64xf32>
    %93 = arith.addf %91, %92 : vector<16x64xf32>
    %94 = arith.mulf %93, %93 : vector<16x64xf32>
    %95 = arith.mulf %93, %94 : vector<16x64xf32>
    %cst_36 = arith.constant 4.471500e-02 : f32
    %96 = vector.broadcast %cst_36 : f32 to vector<16x64xf32>
    %97 = arith.mulf %96, %95 : vector<16x64xf32>
    %98 = arith.addf %93, %97 : vector<16x64xf32>
    %cst_37 = arith.constant 0.797884583 : f32
    %99 = vector.broadcast %cst_37 : f32 to vector<16x64xf32>
    %100 = arith.mulf %99, %98 : vector<16x64xf32>
    %101 = math.tanh %100 : vector<16x64xf32>
    %cst_38 = arith.constant 1.000000e+00 : f32
    %102 = vector.broadcast %cst_38 : f32 to vector<16x64xf32>
    %103 = arith.addf %102, %101 : vector<16x64xf32>
    %cst_39 = arith.constant 5.000000e-01 : f32
    %104 = vector.broadcast %cst_39 : f32 to vector<16x64xf32>
    %105 = arith.mulf %104, %103 : vector<16x64xf32>
    %106 = arith.mulf %93, %105 : vector<16x64xf32>
    %107 = arith.truncf %106 : vector<16x64xf32> to vector<16x64xbf16>
    %cst_40 = arith.constant dense<0.000000e+00> : vector<16x32xf32>
    %108 = tpu.matmul %107, %14, %cst_40 {dimension_numbers = #tpu.dot_dimension_numbers<[1], [1], [0], [0], [0, 0, 1, 0], [], []>} : vector<16x64xbf16>, vector<32x64xbf16>, vector<16x32xf32> -> vector<16x32xf32>
    %109 = vector.broadcast %6 : vector<1x32xf32> to vector<16x32xf32>
    %110 = arith.addf %108, %109 : vector<16x32xf32>
    %111 = arith.addf %89, %110 : vector<16x32xf32>
    %cst_41 = arith.constant dense<0.000000e+00> : vector<16xf32>
    %112 = vector.multi_reduction <add>, %111, %cst_41 [1] : vector<16x32xf32> to vector<16xf32>
    %113 = vector.shape_cast %112 : vector<16xf32> to vector<16x1xf32>
    %cst_42 = arith.constant 3.200000e+01 : f32
    %114 = vector.broadcast %cst_42 : f32 to vector<16x1xf32>
    %115 = arith.divf %113, %114 : vector<16x1xf32>
    %116 = vector.broadcast %115 : vector<16x1xf32> to vector<16x32xf32>
    %117 = arith.subf %111, %116 : vector<16x32xf32>
    %118 = arith.mulf %117, %117 : vector<16x32xf32>
    %cst_43 = arith.constant dense<0.000000e+00> : vector<16xf32>
    %119 = vector.multi_reduction <add>, %118, %cst_43 [1] : vector<16x32xf32> to vector<16xf32>
    %120 = vector.shape_cast %119 : vector<16xf32> to vector<16x1xf32>
    %cst_44 = arith.constant 3.200000e+01 : f32
    %121 = vector.broadcast %cst_44 : f32 to vector<16x1xf32>
    %122 = arith.divf %120, %121 : vector<16x1xf32>
    %123 = vector.broadcast %115 : vector<16x1xf32> to vector<16x32xf32>
    %124 = arith.subf %111, %123 : vector<16x32xf32>
    %cst_45 = arith.constant 9.99999996E-13 : f32
    %125 = vector.broadcast %cst_45 : f32 to vector<16x1xf32>
    %126 = arith.addf %122, %125 : vector<16x1xf32>
    %127 = math.rsqrt %126 : vector<16x1xf32>
    %128 = vector.broadcast %127 : vector<16x1xf32> to vector<16x32xf32>
    %129 = arith.mulf %124, %128 : vector<16x32xf32>
    %130 = vector.broadcast %7 : vector<1x32xf32> to vector<16x32xf32>
    %131 = arith.mulf %129, %130 : vector<16x32xf32>
    %132 = vector.broadcast %8 : vector<1x32xf32> to vector<16x32xf32>
    %133 = arith.addf %131, %132 : vector<16x32xf32>
    %134 = arith.truncf %133 : vector<16x32xf32> to vector<16x32xbf16>
    %cst_46 = arith.constant dense<0.000000e+00> : vector<16x32xf32>
    %135 = tpu.matmul %134, %15, %cst_46 {dimension_numbers = #tpu.dot_dimension_numbers<[1], [0], [0], [1], [0, 0, 1, 1], [], []>} : vector<16x32xbf16>, vector<32x32xbf16>, vector<16x32xf32> -> vector<16x32xf32>
    %136 = vector.broadcast %9 : vector<1x32xf32> to vector<16x32xf32>
    %137 = arith.addf %135, %136 : vector<16x32xf32>
    %138 = math.tanh %137 : vector<16x32xf32>
    %139 = arith.truncf %138 : vector<16x32xf32> to vector<16x32xbf16>
    %cst_47 = arith.constant dense<0.000000e+00> : vector<16x128xf32>
    %140 = tpu.matmul %139, %16, %cst_47 {dimension_numbers = #tpu.dot_dimension_numbers<[1], [0], [0], [1], [0, 0, 1, 1], [], []>} : vector<16x32xbf16>, vector<32x128xbf16>, vector<16x128xf32> -> vector<16x128xf32>
    %141 = vector.broadcast %10 : vector<1x128xf32> to vector<16x128xf32>
    %142 = arith.addf %140, %141 : vector<16x128xf32>
    %c0_48 = arith.constant 0 : index
    %c0_49 = arith.constant 0 : index
    %143 = vector.load %arg4[%c0_48, %c0_49] : memref<16x128xf32, #tpu.memory_space<vmem>>, vector<16x128xf32>
    tpu.vector_store %arg4[%c0_48, %c0_49], %142 {strides = array<i32>} : memref<16x128xf32, #tpu.memory_space<vmem>>, vector<16x128xf32>,
    return
  }
}

</mosaic_0001>

<llo_original>
// kernel: tpu_custom_call.1
$region0: #{tpu_custom_call.1}
  #allocation0 [shape = 'u32[]', space=smem, size = 0x4, offset = 0x4, fixed_abs, tag = 'smem constant byte address 0x4 - core index']
  #allocation1 [shape = 'u32[144,128]{1,0:T(1,128)}', space=vmem, size = 0x12000, scoped, tag = 'internal scratch']
  %s0 = inlined_call_operand.hbm [shape: s32[2], index: 0, kind: input, shape index: {}]
  %s1 = inlined_call_operand.hbm [shape: f32[16,32], index: 1, kind: input, shape index: {}]
  %s2 = inlined_call_operand.hbm [shape: bf16[32,768], index: 2, kind: input, shape index: {}]
  %s3 = inlined_call_operand.hbm [shape: f32[16,128], index: 3, kind: input, shape index: {}]
  %s4 = inlined_call_operand.hbm [shape: f32[16,128], index: 4, kind: output, shape index: {}]
  %s5 = sld [smem:[#allocation0]]
  $region42: #{tpu_custom_call.1} parent=0
    _
  %s7 = ssub.s32 1, %s5
  %s8 = scalar_select 0, %s7, %s5
  $region1: #{tpu_custom_call.1} parent=0
    #allocation2 [shape = 'u8[512]{0}', space=smem, size = 0x200, scoped, tag = 'input window, operand 0, single buffered']
    #allocation3 [shape = 's32[1]{0}', space=sflag, size = 0x4, scoped, tag = 'scoped memory for tpu_custom_call.1']
    #allocation4 [shape = 's32[1]{0}', space=sflag, size = 0x4, scoped, tag = 'scoped memory for tpu_custom_call.1']
    #allocation5 [shape = 's32[1]{0}', space=sflag, size = 0x4, scoped, tag = 'scoped memory for tpu_custom_call.1']
    #allocation6 [shape = 'u8[8192]{0}', space=vmem, size = 0x2000, scoped, tag = 'input window, operand 1, single buffered']
    #allocation7 [shape = 'u8[49152]{0}', space=vmem, size = 0xc000, scoped, tag = 'input window, operand 2, single buffered']
    #allocation8 [shape = 's32[1]{0}', space=sflag, size = 0x4, scoped, tag = 'scoped memory for tpu_custom_call.1']
    #allocation9 [shape = 'u8[8192]{0}', space=vmem, size = 0x2000, scoped, tag = 'input window, operand 3, single buffered']
    #allocation10 [shape = 'u8[8192]{0}', space=vmem, size = 0x2000, scoped, tag = 'output window, operand 0, single buffered']
    %9 = vsyncpa [#allocation5], 0
    %10 = vsyncpa [#allocation3], 0
    %11 = vsyncpa [#allocation8], 0
    %12 = vsyncpa [#allocation4], 0
    // Predicated region
    $region2: #{tpu_custom_call.1} parent=1 // pred_check
      _
    $region3: #{tpu_custom_call.1} parent=1 // pred_check_branch
      %14 = sbr.rel (0) target = $region5
    $region4: #{tpu_custom_call.1} parent=1 // pred_region
      %s16 = ssub.s32 16, 16
      %17 = vsyncadd [#allocation5], %s16
      %20 = dma.hbm_to_smem %s0, 16, [#allocation2], [#allocation5]
    $region5: #{tpu_custom_call.1} parent=1 // pred_fallthru
      _
    // Predicated region
    $region6: #{tpu_custom_call.1} parent=1 // pred_check
      _
    $region7: #{tpu_custom_call.1} parent=1 // pred_check_branch
      %22 = sbr.rel (0) target = $region9
    $region8: #{tpu_custom_call.1} parent=1 // pred_region
      %s24 = ssub.s32 256, 256
      %25 = vsyncadd [#allocation3], %s24
      %s26 = sshll.u32 [#allocation6], 4
      %s27 = int_to_ptr.vmem [resolvable:$true] %s26
      %32 = dma.hbm_to_vmem [thread:$0]  %s1, 256, %s27, [#allocation3], 128, 128, 8
    $region9: #{tpu_custom_call.1} parent=1 // pred_fallthru
      _
    // Predicated region
    $region10: #{tpu_custom_call.1} parent=1 // pred_check
      _
    $region11: #{tpu_custom_call.1} parent=1 // pred_check_branch
      %34 = sbr.rel (0) target = $region13
    $region12: #{tpu_custom_call.1} parent=1 // pred_region
      %s36 = ssub.s32 1536, 1536
      %37 = vsyncadd [#allocation8], %s36
      %s38 = sshll.u32 [#allocation7], 4
      %s39 = int_to_ptr.vmem [resolvable:$true] %s38
      %44 = dma.hbm_to_vmem [thread:$0]  %s2, 1536, %s39, [#allocation8], 384, 384, 24
    $region13: #{tpu_custom_call.1} parent=1 // pred_fallthru
      _
    // Predicated region
    $region14: #{tpu_custom_call.1} parent=1 // pred_check
      _
    $region15: #{tpu_custom_call.1} parent=1 // pred_check_branch
      %46 = sbr.rel (0) target = $region17
    $region16: #{tpu_custom_call.1} parent=1 // pred_region
      %s48 = ssub.s32 256, 256
      %49 = vsyncadd [#allocation8], %s48
      %s50 = sshll.u32 [#allocation9], 4
      %s51 = int_to_ptr.vmem [resolvable:$true] %s50
      %56 = dma.hbm_to_vmem [thread:$0]  %s3, 256, %s51, [#allocation8], 128, 128, 8
    $region17: #{tpu_custom_call.1} parent=1 // pred_fallthru
      _
    // Predicated region
    $region18: #{tpu_custom_call.1} parent=1 // pred_check
      _
    $region19: #{tpu_custom_call.1} parent=1 // pred_check_branch
      %58 = sbr.rel (0) target = $region21
    $region20: #{tpu_custom_call.1} parent=1 // pred_region
      %59 = dma.done [#allocation5], 16
    $region21: #{tpu_custom_call.1} parent=1 // pred_fallthru
      _
    // Predicated region
    $region22: #{tpu_custom_call.1} parent=1 // pred_check
      _
    $region23: #{tpu_custom_call.1} parent=1 // pred_check_branch
      %61 = sbr.rel (0) target = $region25
    $region24: #{tpu_custom_call.1} parent=1 // pred_region
      %62 = dma.done [#allocation3], 256
    $region25: #{tpu_custom_call.1} parent=1 // pred_fallthru
      _
    // Predicated region
    $region26: #{tpu_custom_call.1} parent=1 // pred_check
      _
    $region27: #{tpu_custom_call.1} parent=1 // pred_check_branch
      %64 = sbr.rel (0) target = $region29
    $region28: #{tpu_custom_call.1} parent=1 // pred_region
      %65 = dma.done [#allocation8], 1536
    $region29: #{tpu_custom_call.1} parent=1 // pred_fallthru
      _
    // Predicated region
    $region30: #{tpu_custom_call.1} parent=1 // pred_check
      _
    $region31: #{tpu_custom_call.1} parent=1 // pred_check_branch
      %67 = sbr.rel (0) target = $region33
    $region32: #{tpu_custom_call.1} parent=1 // pred_region
      %68 = dma.done [#allocation8], 256
    $region33: #{tpu_custom_call.1} parent=1 // pred_fallthru
      _
    %69 = sfence
    %v71 = vld [vmem:[#allocation6] sm:$0xff]
    %v72 = vld [vmem:[#allocation6 + $0x8] sm:$0xff]
    %v73 = vld [vmem:[#allocation9] sm:$0x1]
    %v74 = vld [vmem:[#allocation9 + $0x1] sm:$0x1]
    %v75 = vld [vmem:[#allocation9 + $0x2] sm:$0x1]
    %v76 = vld [vmem:[#allocation9 + $0x3] sm:$0x1]
    %v77 = vld [vmem:[#allocation9 + $0x4] sm:$0x1]
    %v78 = vld [vmem:[#allocation9 + $0x5] sm:$0x1]
    %v79 = vld [vmem:[#allocation9 + $0x6] sm:$0x1]
    %v80 = vld [vmem:[#allocation9 + $0x7] sm:$0x1]
    %v81 = vld [vmem:[#allocation9 + $0x8] sm:$0x1]
    %v82 = vld [vmem:[#allocation9 + $0x9] sm:$0x1]
    %v83 = vld [vmem:[#allocation7] sm:$0xf]
    %v84 = vld [vmem:[#allocation7 + $0x18] sm:$0xf]
    %v85 = vld [vmem:[#allocation7 + $0x30] sm:$0xf]
    %v86 = vld [vmem:[#allocation7 + $0x48] sm:$0xf]
    %v87 = vld [vmem:[#allocation7 + $0x4] sm:$0xf]
    %v88 = vld [vmem:[#allocation7 + $0x1c] sm:$0xf]
    %v89 = vld [vmem:[#allocation7 + $0x34] sm:$0xf]
    %v90 = vld [vmem:[#allocation7 + $0x4c] sm:$0xf]
    %v91 = vld [vmem:[#allocation7 + $0x8] sm:$0xf]
    %v92 = vld [vmem:[#allocation7 + $0x20] sm:$0xf]
    %v93 = vld [vmem:[#allocation7 + $0x38] sm:$0xf]
    %v94 = vld [vmem:[#allocation7 + $0x50] sm:$0xf]
    %v95 = vld [vmem:[#allocation7 + $0xc] sm:$0xf]
    %v96 = vld [vmem:[#allocation7 + $0x24] sm:$0xf]
    %v97 = vld [vmem:[#allocation7 + $0x3c] sm:$0xf]
    %v98 = vld [vmem:[#allocation7 + $0x54] sm:$0xf]
    %v99 = vld [vmem:[#allocation7 + $0x10] sm:$0xf]
    %v100 = vld [vmem:[#allocation7 + $0x28] sm:$0xf]
    %v101 = vld [vmem:[#allocation7 + $0x40] sm:$0xf]
    %v102 = vld [vmem:[#allocation7 + $0x58] sm:$0xf]
    %v103 = vld [vmem:[#allocation7 + $0x14] sm:$0xf]
    %v104 = vld [vmem:[#allocation7 + $0x2c] sm:$0xf]
    %v105 = vld [vmem:[#allocation7 + $0x44] sm:$0xf]
    %v106 = vld [vmem:[#allocation7 + $0x5c] sm:$0xf]
    %v107 = vpack.c.bf16 %v72, %v71
    %v108 = vlaneseq
    %v109 = vshrl.u32 %v108, 7
    %v110 = vsub.s32 0, %v109
    %v111 = vrot.slane %v73, %v110
    %v116 = vunpack.c.l.b16 %v83
    %v117 = vunpack.c.l.b16 %v84
    %v118 = vunpack.c.l.b16 %v85
    %v119 = vunpack.c.l.b16 %v86
    %v120 = vpack.c.b16 %v117, %v116
    %v121 = vpack.c.b16 %v119, %v118
    %vm124 = vcmask 261120
    %v126 = vsel %vm124, %v107, 0
    %128 = vmatprep.subr.bf16.mxu0 0
    %129 = vmatpush1.bf16.msra.mxu0 0
    %130 = vmatprep.subr.bf16.mxu0 0
    %131 = vmatpush1.bf16.msra.mxu0 0
    %132 = vmatprep.subr.bf16.mxu0 0
    %133 = vmatpush1.bf16.msra.mxu0 0
    %134 = vmatprep.subr.bf16.mxu0 0
    %135 = vmatpush1.bf16.msra.mxu0 0
    %136 = vmatprep.subr.bf16.mxu0 0
    %137 = vmatpush1.bf16.msra.mxu0 0
    %138 = vmatprep.subr.bf16.mxu0 0
    %139 = vmatpush1.bf16.msra.mxu0 0
    %140 = vmatprep.subr.bf16.mxu0 0
    %141 = vmatpush1.bf16.msra.mxu0 %v121
    %142 = vmatprep.subr.bf16.mxu0 0
    %143 = vmatpush1.bf16.msra.mxu0 %v120
    %144 = vmatprep.subr.bf16.mxu0 0
    %145 = vmatpush2.bf16.msra.mxu0 0
    %146 = vmatprep.subr.bf16.mxu0 0
    %147 = vmatpush2.bf16.msra.mxu0 0
    %148 = vmatprep.subr.bf16.mxu0 0
    %149 = vmatpush2.bf16.msra.mxu0 0
    %150 = vmatprep.subr.bf16.mxu0 0
    %151 = vmatpush2.bf16.msra.mxu0 0
    %152 = vmatprep.subr.bf16.mxu0 0
    %153 = vmatpush2.bf16.msra.mxu0 0
    %154 = vmatprep.subr.bf16.mxu0 0
    %155 = vmatpush2.bf16.msra.mxu0 0
    %156 = vmatprep.subr.bf16.mxu0 0
    %157 = vmatpush2.bf16.msra.mxu0 0
    %158 = vmatprep.subr.bf16.mxu0 0
    %159 = vmatpush2.bf16.msra.mxu0 0
    %160 = vmatprep.mubr.bf16.mxu0 0
    %161 = vmatmul.mubr.bf16.gmra.mxu0 %v126
    %v162 = vpop.f32.mrf.mxu0
    %v163 = vadd.f32 %v111, %v162
    %v164 = vpop.f32.mrf.mxu0
    %v165 = vpop.f32.mrf.mxu0
    %v166 = vadd.f32 %v111, %v165
    %v167 = vpop.f32.mrf.mxu0
    %168 = vdwg.mxu0
    %v169 = vpack.c.bf16 %v166, %v163
    %171 = vrot.lane.b32.xlu0 %v169, 96
    %v172 = vpop.permute.xlu0 %171
    %v174 = vsel %vm124, %v169, 0
    %v177 = vsel %vm124, %v172, 0
    %179 = vmatprep.subr.bf16.mxu0 0
    %180 = vmatpush1.bf16.xpose.msra.mxu0 0
    %181 = vmatprep.subr.bf16.mxu0 0
    %182 = vmatpush1.bf16.xpose.msra.mxu0 0
    %183 = vmatprep.subr.bf16.mxu0 0
    %184 = vmatpush1.bf16.xpose.msra.mxu0 0
    %185 = vmatprep.subr.bf16.mxu0 0
    %186 = vmatpush1.bf16.xpose.msra.mxu0 0
    %187 = vmatprep.subr.bf16.mxu0 0
    %188 = vmatpush1.bf16.xpose.msra.mxu0 0
    %189 = vmatprep.subr.bf16.mxu0 0
    %190 = vmatpush1.bf16.xpose.msra.mxu0 0
    %191 = vmatprep.subr.bf16.mxu0 0
    %192 = vmatpush1.bf16.xpose.msra.mxu0 0
    %193 = vmatprep.subr.bf16.mxu0 0
    %194 = vmatpush1.bf16.xpose.msra.mxu0 %v177
    %195 = vmatprep.subr.bf16.mxu0 0
    %196 = vmatpush2.bf16.xpose.msra.mxu0 0
    %197 = vmatprep.subr.bf16.mxu0 0
    %198 = vmatpush2.bf16.xpose.msra.mxu0 0
    %199 = vmatprep.subr.bf16.mxu0 0
    %200 = vmatpush2.bf16.xpose.msra.mxu0 0
    %201 = vmatprep.subr.bf16.mxu0 0
    %202 = vmatpush2.bf16.xpose.msra.mxu0 0
    %203 = vmatprep.subr.bf16.mxu0 0
    %204 = vmatpush2.bf16.xpose.msra.mxu0 0
    %205 = vmatprep.subr.bf16.mxu0 0
    %206 = vmatpush2.bf16.xpose.msra.mxu0 0
    %207 = vmatprep.subr.bf16.mxu0 0
    %208 = vmatpush2.bf16.xpose.msra.mxu0 0
    %209 = vmatprep.subr.bf16.mxu0 0
    %210 = vmatpush2.bf16.xpose.msra.mxu0 0
    %211 = vmatprep.mubr.bf16.mxu0 0
    %212 = vmatmul.mubr.bf16.gmra.mxu0 %v174
    %v213 = vpop.f32.mrf.mxu0
    %v214 = vadd.f32 0.0, %v213
    %v215 = vpop.f32.mrf.mxu0
    %v216 = vpop.f32.mrf.mxu0
    %v217 = vadd.f32 0.0, %v216
    %v218 = vpop.f32.mrf.mxu0
    %219 = vdwg.mxu0
    %v220 = vmul.f32 %v214, 0.17677669
    %v221 = vmul.f32 %v217, 0.17677669
    %v222 = vlaneseq
    %v223 = vshrl.u32 %v222, 7
    %v224 = vadd.s32 %v223, 8
    %v225 = vlaneseq
    %v226 = vand.u32 %v225, 127
    %v227 = vshra.s32 %v223, 3
    %v228 = vshra.s32 %v224, 3
    %v229 = vshra.s32 %v226, 3
    %v230 = vand.u32 %v226, 7
    %s231 = sld [smem:[#allocation2]]
    %v232 = vstv %s231
    %vm233 = vcmp.eq.s32.totalorder %v229, 1
    %s234 = sld [smem:[#allocation2 + $0x1]]
    %v235 = vstv %s234
    %v236 = vsel %vm233, %v235, %v232
    %vm237 = vcmp.eq.s32.totalorder %v227, %v229
    %vm238 = vcmp.eq.s32.totalorder %v228, %v229
    %vm239 = vcmp.lt.s32.totalorder %v230, %v236
    %vm240 = vmand %vm237, %vm239
    %vm241 = vmand %vm238, %vm239
    %v242 = vsel %vm240, 0.0, -1e+09
    %v243 = vsel %vm241, 0.0, -1e+09
    %v244 = vadd.f32 %v220, %v242
    %v245 = vadd.f32 %v221, %v243
    %vm246 = vcmask 130048
    %v247 = vsel %vm246, %v244, -inf
    %248 = vmax.xlane.f32.xlu0 %v247
    %v249 = vpop.xlane.xlu0 %248
    %v250 = vsel %vm246, %v245, -inf
    %251 = vmax.xlane.f32.xlu0 %v250
    %v252 = vpop.xlane.xlu0 %251
    %v253 = vsub.f32 %v244, %v249
    %v254 = vsub.f32 %v245, %v252
    %v255 = vmul.f32 %v253, 1.442695
    %v256 = vpow.pop %v255
    %v257 = vmul.f32 %v254, 1.442695
    %v258 = vpow.pop %v257
    %v259 = vsel %vm246, %v256, 0.0
    %260 = vadd.xlane.f32.xlu0 %v259
    %v261 = vpop.xlane.xlu0 %260
    %v262 = vsel %vm246, %v258, 0.0
    %263 = vadd.xlane.f32.xlu0 %v262
    %v264 = vpop.xlane.xlu0 %263
    %v265 = vrcp.pop %v261
    %v266 = vmul.f32 %v256, %v265
    %v267 = vrcp.pop %v264
    %v268 = vmul.f32 %v258, %v267
    %v269 = vpack.c.bf16 %v268, %v266
    %270 = vrot.lane.b32.xlu0 %v169, 64
    %v271 = vpop.permute.xlu0 %270
    %v274 = vsel %vm246, %v269, 0
    %276 = vmatprep.subr.bf16.mxu0 0
    %277 = vmatpush1.bf16.msra.mxu0 0
    %278 = vmatprep.subr.bf16.mxu0 0
    %279 = vmatpush1.bf16.msra.mxu0 0
    %280 = vmatprep.subr.bf16.mxu0 0
    %281 = vmatpush1.bf16.msra.mxu0 0
    %282 = vmatprep.subr.bf16.mxu0 0
    %283 = vmatpush1.bf16.msra.mxu0 0
    %284 = vmatprep.subr.bf16.mxu0 0
    %285 = vmatpush1.bf16.msra.mxu0 0
    %286 = vmatprep.subr.bf16.mxu0 0
    %287 = vmatpush1.bf16.msra.mxu0 0
    %288 = vmatprep.subr.bf16.mxu0 0
    %289 = vmatpush1.bf16.msra.mxu0 0
    %290 = vmatprep.subr.bf16.mxu0 0
    %291 = vmatpush1.bf16.msra.mxu0 %v271
    %292 = vmatprep.subr.bf16.mxu0 0
    %293 = vmatpush2.bf16.msra.mxu0 0
    %294 = vmatprep.subr.bf16.mxu0 0
    %295 = vmatpush2.bf16.msra.mxu0 0
    %296 = vmatprep.subr.bf16.mxu0 0
    %297 = vmatpush2.bf16.msra.mxu0 0
    %298 = vmatprep.subr.bf16.mxu0 0
    %299 = vmatpush2.bf16.msra.mxu0 0
    %300 = vmatprep.subr.bf16.mxu0 0
    %301 = vmatpush2.bf16.msra.mxu0 0
    %302 = vmatprep.subr.bf16.mxu0 0
    %303 = vmatpush2.bf16.msra.mxu0 0
    %304 = vmatprep.subr.bf16.mxu0 0
    %305 = vmatpush2.bf16.msra.mxu0 0
    %306 = vmatprep.subr.bf16.mxu0 0
    %307 = vmatpush2.bf16.msra.mxu0 0
    %308 = vmatprep.mubr.bf16.mxu0 0
    %309 = vmatmul.mubr.bf16.gmra.mxu0 %v274
    %v310 = vpop.f32.mrf.mxu0
    %v311 = vadd.f32 0.0, %v310
    %v312 = vpop.f32.mrf.mxu0
    %v313 = vpop.f32.mrf.mxu0
    %v314 = vadd.f32 0.0, %v313
    %v315 = vpop.f32.mrf.mxu0
    %316 = vdwg.mxu0
    %v317 = vpack.c.bf16 %v314, %v311
    %v318 = vlaneseq
    %v319 = vshrl.u32 %v318, 7
    %v320 = vsub.s32 0, %v319
    %v321 = vrot.slane %v74, %v320
    %v326 = vunpack.c.l.b16 %v87
    %v327 = vunpack.c.l.b16 %v88
    %v328 = vunpack.c.l.b16 %v89
    %v329 = vunpack.c.l.b16 %v90
    %v330 = vpack.c.b16 %v327, %v326
    %v331 = vpack.c.b16 %v329, %v328
    %v335 = vsel %vm124, %v317, 0
    %337 = vmatprep.subr.bf16.mxu0 0
    %338 = vmatpush1.bf16.msra.mxu0 0
    %339 = vmatprep.subr.bf16.mxu0 0
    %340 = vmatpush1.bf16.msra.mxu0 0
    %341 = vmatprep.subr.bf16.mxu0 0
    %342 = vmatpush1.bf16.msra.mxu0 0
    %343 = vmatprep.subr.bf16.mxu0 0
    %344 = vmatpush1.bf16.msra.mxu0 0
    %345 = vmatprep.subr.bf16.mxu0 0
    %346 = vmatpush1.bf16.msra.mxu0 0
    %347 = vmatprep.subr.bf16.mxu0 0
    %348 = vmatpush1.bf16.msra.mxu0 0
    %349 = vmatprep.subr.bf16.mxu0 0
    %350 = vmatpush1.bf16.msra.mxu0 %v331
    %351 = vmatprep.subr.bf16.mxu0 0
    %352 = vmatpush1.bf16.msra.mxu0 %v330
    %353 = vmatprep.subr.bf16.mxu0 0
    %354 = vmatpush2.bf16.msra.mxu0 0
    %355 = vmatprep.subr.bf16.mxu0 0
    %356 = vmatpush2.bf16.msra.mxu0 0
    %357 = vmatprep.subr.bf16.mxu0 0
    %358 = vmatpush2.bf16.msra.mxu0 0
    %359 = vmatprep.subr.bf16.mxu0 0
    %360 = vmatpush2.bf16.msra.mxu0 0
    %361 = vmatprep.subr.bf16.mxu0 0
    %362 = vmatpush2.bf16.msra.mxu0 0
    %363 = vmatprep.subr.bf16.mxu0 0
    %364 = vmatpush2.bf16.msra.mxu0 0
    %365 = vmatprep.subr.bf16.mxu0 0
    %366 = vmatpush2.bf16.msra.mxu0 0
    %367 = vmatprep.subr.bf16.mxu0 0
    %368 = vmatpush2.bf16.msra.mxu0 0
    %369 = vmatprep.mubr.bf16.mxu0 0
    %370 = vmatmul.mubr.bf16.gmra.mxu0 %v335
    %v371 = vpop.f32.mrf.mxu0
    %v372 = vadd.f32 %v321, %v371
    %v373 = vpop.f32.mrf.mxu0
    %v374 = vpop.f32.mrf.mxu0
    %v375 = vadd.f32 %v321, %v374
    %v376 = vpop.f32.mrf.mxu0
    %377 = vdwg.mxu0
    %v378 = vadd.f32 %v71, %v372
    %v379 = vadd.f32 %v72, %v375
    %v380 = vsel %vm124, %v378, 0.0
    %381 = vadd.xlane.f32.xlu0 %v380
    %v382 = vpop.xlane.xlu0 %381
    %v383 = vsel %vm124, %v379, 0.0
    %384 = vadd.xlane.f32.xlu0 %v383
    %v385 = vpop.xlane.xlu0 %384
    %v386 = vrcp.pop 32.0
    %v387 = vmul.f32 %v382, %v386
    %v388 = vmul.f32 %v385, %v386
    %v389 = vsub.f32 %v378, %v387
    %v390 = vsub.f32 %v379, %v388
    %v391 = vmul.f32 %v389, %v389
    %v392 = vmul.f32 %v390, %v390
    %v393 = vsel %vm124, %v391, 0.0
    %394 = vadd.xlane.f32.xlu0 %v393
    %v395 = vpop.xlane.xlu0 %394
    %v396 = vsel %vm124, %v392, 0.0
    %397 = vadd.xlane.f32.xlu0 %v396
    %v398 = vpop.xlane.xlu0 %397
    %v399 = vmul.f32 %v395, %v386
    %v400 = vmul.f32 %v398, %v386
    %v401 = vadd.f32 %v399, 1e-12
    %v402 = vadd.f32 %v400, 1e-12
    %v403 = vrsqrt.pop %v401
    %v404 = vrsqrt.pop %v402
    %v405 = vmul.f32 %v389, %v403
    %v406 = vmul.f32 %v390, %v404
    %v407 = vlaneseq
    %v408 = vshrl.u32 %v407, 7
    %v409 = vsub.s32 0, %v408
    %v410 = vrot.slane %v75, %v409
    %v411 = vmul.f32 %v405, %v410
    %v412 = vmul.f32 %v406, %v410
    %v413 = vlaneseq
    %v414 = vshrl.u32 %v413, 7
    %v415 = vsub.s32 0, %v414
    %v416 = vrot.slane %v76, %v415
    %v417 = vadd.f32 %v411, %v416
    %v418 = vadd.f32 %v412, %v416
    %v419 = vpack.c.bf16 %v418, %v417
    %v420 = vlaneseq
    %v421 = vshrl.u32 %v420, 7
    %v422 = vsub.s32 0, %v421
    %v423 = vrot.slane %v77, %v422
    %v428 = vunpack.c.l.b16 %v91
    %v429 = vunpack.c.l.b16 %v92
    %v430 = vunpack.c.l.b16 %v93
    %v431 = vunpack.c.l.b16 %v94
    %v432 = vpack.c.b16 %v429, %v428
    %v433 = vpack.c.b16 %v431, %v430
    %v437 = vsel %vm124, %v419, 0
    %439 = vmatprep.subr.bf16.mxu0 0
    %440 = vmatpush1.bf16.msra.mxu0 0
    %441 = vmatprep.subr.bf16.mxu0 0
    %442 = vmatpush1.bf16.msra.mxu0 0
    %443 = vmatprep.subr.bf16.mxu0 0
    %444 = vmatpush1.bf16.msra.mxu0 0
    %445 = vmatprep.subr.bf16.mxu0 0
    %446 = vmatpush1.bf16.msra.mxu0 0
    %447 = vmatprep.subr.bf16.mxu0 0
    %448 = vmatpush1.bf16.msra.mxu0 0
    %449 = vmatprep.subr.bf16.mxu0 0
    %450 = vmatpush1.bf16.msra.mxu0 0
    %451 = vmatprep.subr.bf16.mxu0 0
    %452 = vmatpush1.bf16.msra.mxu0 %v433
    %453 = vmatprep.subr.bf16.mxu0 0
    %454 = vmatpush1.bf16.msra.mxu0 %v432
    %455 = vmatprep.subr.bf16.mxu0 0
    %456 = vmatpush2.bf16.msra.mxu0 0
    %457 = vmatprep.subr.bf16.mxu0 0
    %458 = vmatpush2.bf16.msra.mxu0 0
    %459 = vmatprep.subr.bf16.mxu0 0
    %460 = vmatpush2.bf16.msra.mxu0 0
    %461 = vmatprep.subr.bf16.mxu0 0
    %462 = vmatpush2.bf16.msra.mxu0 0
    %463 = vmatprep.subr.bf16.mxu0 0
    %464 = vmatpush2.bf16.msra.mxu0 0
    %465 = vmatprep.subr.bf16.mxu0 0
    %466 = vmatpush2.bf16.msra.mxu0 0
    %467 = vmatprep.subr.bf16.mxu0 0
    %468 = vmatpush2.bf16.msra.mxu0 0
    %469 = vmatprep.subr.bf16.mxu0 0
    %470 = vmatpush2.bf16.msra.mxu0 0
    %471 = vmatprep.mubr.bf16.mxu0 0
    %472 = vmatmul.mubr.bf16.gmra.mxu0 %v437
    %v473 = vpop.f32.mrf.mxu0
    %v474 = vadd.f32 %v423, %v473
    %v475 = vpop.f32.mrf.mxu0
    %v476 = vpop.f32.mrf.mxu0
    %v477 = vadd.f32 %v423, %v476
    %v478 = vpop.f32.mrf.mxu0
    %479 = vdwg.mxu0
    %v480 = vmul.f32 %v474, %v474
    %v481 = vmul.f32 %v477, %v477
    %v482 = vmul.f32 %v474, %v480
    %v483 = vmul.f32 %v477, %v481
    %v484 = vmul.f32 %v482, 0.044715
    %v485 = vmul.f32 %v483, 0.044715
    %v486 = vadd.f32 %v474, %v484
    %v487 = vadd.f32 %v477, %v485
    %v488 = vmul.f32 %v486, 0.7978846
    %v489 = vmul.f32 %v487, 0.7978846
    %v490 = vtanh.pop %v488
    %v491 = vtanh.pop %v489
    %v492 = vadd.f32 %v490, 1.0
    %v493 = vadd.f32 %v491, 1.0
    %v494 = vmul.f32 %v492, 0.5
    %v495 = vmul.f32 %v493, 0.5
    %v496 = vmul.f32 %v474, %v494
    %v497 = vmul.f32 %v477, %v495
    %v498 = vpack.c.bf16 %v497, %v496
    %v499 = vlaneseq
    %v500 = vshrl.u32 %v499, 7
    %v501 = vsub.s32 0, %v500
    %v502 = vrot.slane %v78, %v501
    %v507 = vunpack.c.l.b16 %v95
    %v508 = vunpack.c.l.b16 %v96
    %v509 = vunpack.c.l.b16 %v97
    %v510 = vunpack.c.l.b16 %v98
    %v511 = vpack.c.b16 %v508, %v507
    %v512 = vpack.c.b16 %v510, %v509
    %vm513 = vcmask 523264
    %v515 = vsel %vm513, %v498, 0
    %v518 = vsel %vm513, %v511, 0
    %v521 = vsel %vm513, %v512, 0
    %523 = vmatprep.subr.bf16.mxu0 0
    %524 = vmatpush1.bf16.xpose.msra.mxu0 0
    %525 = vmatprep.subr.bf16.mxu0 0
    %526 = vmatpush1.bf16.xpose.msra.mxu0 0
    %527 = vmatprep.subr.bf16.mxu0 0
    %528 = vmatpush1.bf16.xpose.msra.mxu0 0
    %529 = vmatprep.subr.bf16.mxu0 0
    %530 = vmatpush1.bf16.xpose.msra.mxu0 0
    %531 = vmatprep.subr.bf16.mxu0 0
    %532 = vmatpush1.bf16.xpose.msra.mxu0 0
    %533 = vmatprep.subr.bf16.mxu0 0
    %534 = vmatpush1.bf16.xpose.msra.mxu0 0
    %535 = vmatprep.subr.bf16.mxu0 0
    %536 = vmatpush1.bf16.xpose.msra.mxu0 %v521
    %537 = vmatprep.subr.bf16.mxu0 0
    %538 = vmatpush1.bf16.xpose.msra.mxu0 %v518
    %539 = vmatprep.subr.bf16.mxu0 0
    %540 = vmatpush2.bf16.xpose.msra.mxu0 0
    %541 = vmatprep.subr.bf16.mxu0 0
    %542 = vmatpush2.bf16.xpose.msra.mxu0 0
    %543 = vmatprep.subr.bf16.mxu0 0
    %544 = vmatpush2.bf16.xpose.msra.mxu0 0
    %545 = vmatprep.subr.bf16.mxu0 0
    %546 = vmatpush2.bf16.xpose.msra.mxu0 0
    %547 = vmatprep.subr.bf16.mxu0 0
    %548 = vmatpush2.bf16.xpose.msra.mxu0 0
    %549 = vmatprep.subr.bf16.mxu0 0
    %550 = vmatpush2.bf16.xpose.msra.mxu0 0
    %551 = vmatprep.subr.bf16.mxu0 0
    %552 = vmatpush2.bf16.xpose.msra.mxu0 0
    %553 = vmatprep.subr.bf16.mxu0 0
    %554 = vmatpush2.bf16.xpose.msra.mxu0 0
    %555 = vmatprep.mubr.bf16.mxu0 0
    %556 = vmatmul.mubr.bf16.gmra.mxu0 %v515
    %v557 = vpop.f32.mrf.mxu0
    %v558 = vadd.f32 %v502, %v557
    %v559 = vpop.f32.mrf.mxu0
    %v560 = vpop.f32.mrf.mxu0
    %v561 = vadd.f32 %v502, %v560
    %v562 = vpop.f32.mrf.mxu0
    %563 = vdwg.mxu0
    %v564 = vadd.f32 %v417, %v558
    %v565 = vadd.f32 %v418, %v561
    %v566 = vsel %vm124, %v564, 0.0
    %567 = vadd.xlane.f32.xlu0 %v566
    %v568 = vpop.xlane.xlu0 %567
    %v569 = vsel %vm124, %v565, 0.0
    %570 = vadd.xlane.f32.xlu0 %v569
    %v571 = vpop.xlane.xlu0 %570
    %v572 = vmul.f32 %v568, %v386
    %v573 = vmul.f32 %v571, %v386
    %v574 = vsub.f32 %v564, %v572
    %v575 = vsub.f32 %v565, %v573
    %v576 = vmul.f32 %v574, %v574
    %v577 = vmul.f32 %v575, %v575
    %v578 = vsel %vm124, %v576, 0.0
    %579 = vadd.xlane.f32.xlu0 %v578
    %v580 = vpop.xlane.xlu0 %579
    %v581 = vsel %vm124, %v577, 0.0
    %582 = vadd.xlane.f32.xlu0 %v581
    %v583 = vpop.xlane.xlu0 %582
    %v584 = vmul.f32 %v580, %v386
    %v585 = vmul.f32 %v583, %v386
    %v586 = vadd.f32 %v584, 1e-12
    %v587 = vadd.f32 %v585, 1e-12
    %v588 = vrsqrt.pop %v586
    %v589 = vrsqrt.pop %v587
    %v590 = vmul.f32 %v574, %v588
    %v591 = vmul.f32 %v575, %v589
    %v592 = vlaneseq
    %v593 = vshrl.u32 %v592, 7
    %v594 = vsub.s32 0, %v593
    %v595 = vrot.slane %v79, %v594
    %v596 = vmul.f32 %v590, %v595
    %v597 = vmul.f32 %v591, %v595
    %v598 = vlaneseq
    %v599 = vshrl.u32 %v598, 7
    %v600 = vsub.s32 0, %v599
    %v601 = vrot.slane %v80, %v600
    %v602 = vadd.f32 %v596, %v601
    %v603 = vadd.f32 %v597, %v601
    %v604 = vpack.c.bf16 %v603, %v602
    %v605 = vlaneseq
    %v606 = vshrl.u32 %v605, 7
    %v607 = vsub.s32 0, %v606
    %v608 = vrot.slane %v81, %v607
    %v613 = vunpack.c.l.b16 %v99
    %v614 = vunpack.c.l.b16 %v100
    %v615 = vunpack.c.l.b16 %v101
    %v616 = vunpack.c.l.b16 %v102
    %v617 = vpack.c.b16 %v614, %v613
    %v618 = vpack.c.b16 %v616, %v615
    %v622 = vsel %vm124, %v604, 0
    %624 = vmatprep.subr.bf16.mxu0 0
    %625 = vmatpush1.bf16.msra.mxu0 0
    %626 = vmatprep.subr.bf16.mxu0 0
    %627 = vmatpush1.bf16.msra.mxu0 0
    %628 = vmatprep.subr.bf16.mxu0 0
    %629 = vmatpush1.bf16.msra.mxu0 0
    %630 = vmatprep.subr.bf16.mxu0 0
    %631 = vmatpush1.bf16.msra.mxu0 0
    %632 = vmatprep.subr.bf16.mxu0 0
    %633 = vmatpush1.bf16.msra.mxu0 0
    %634 = vmatprep.subr.bf16.mxu0 0
    %635 = vmatpush1.bf16.msra.mxu0 0
    %636 = vmatprep.subr.bf16.mxu0 0
    %637 = vmatpush1.bf16.msra.mxu0 %v618
    %638 = vmatprep.subr.bf16.mxu0 0
    %639 = vmatpush1.bf16.msra.mxu0 %v617
    %640 = vmatprep.subr.bf16.mxu0 0
    %641 = vmatpush2.bf16.msra.mxu0 0
    %642 = vmatprep.subr.bf16.mxu0 0
    %643 = vmatpush2.bf16.msra.mxu0 0
    %644 = vmatprep.subr.bf16.mxu0 0
    %645 = vmatpush2.bf16.msra.mxu0 0
    %646 = vmatprep.subr.bf16.mxu0 0
    %647 = vmatpush2.bf16.msra.mxu0 0
    %648 = vmatprep.subr.bf16.mxu0 0
    %649 = vmatpush2.bf16.msra.mxu0 0
    %650 = vmatprep.subr.bf16.mxu0 0
    %651 = vmatpush2.bf16.msra.mxu0 0
    %652 = vmatprep.subr.bf16.mxu0 0
    %653 = vmatpush2.bf16.msra.mxu0 0
    %654 = vmatprep.subr.bf16.mxu0 0
    %655 = vmatpush2.bf16.msra.mxu0 0
    %656 = vmatprep.mubr.bf16.mxu0 0
    %657 = vmatmul.mubr.bf16.gmra.mxu0 %v622
    %v658 = vpop.f32.mrf.mxu0
    %v659 = vadd.f32 %v608, %v658
    %v660 = vpop.f32.mrf.mxu0
    %v661 = vpop.f32.mrf.mxu0
    %v662 = vadd.f32 %v608, %v661
    %v663 = vpop.f32.mrf.mxu0
    %664 = vdwg.mxu0
    %v665 = vtanh.pop %v659
    %v666 = vtanh.pop %v662
    %v667 = vpack.c.bf16 %v666, %v665
    %v668 = vlaneseq
    %v669 = vshrl.u32 %v668, 7
    %v670 = vsub.s32 0, %v669
    %v671 = vrot.slane %v82, %v670
    %v676 = vunpack.c.l.b16 %v103
    %v677 = vunpack.c.l.b16 %v104
    %v678 = vunpack.c.l.b16 %v105
    %v679 = vunpack.c.l.b16 %v106
    %v680 = vpack.c.b16 %v677, %v676
    %v681 = vpack.c.b16 %v679, %v678
    %v685 = vsel %vm124, %v667, 0
    %687 = vmatprep.subr.bf16.mxu0 0
    %688 = vmatpush1.bf16.msra.mxu0 0
    %689 = vmatprep.subr.bf16.mxu0 0
    %690 = vmatpush1.bf16.msra.mxu0 0
    %691 = vmatprep.subr.bf16.mxu0 0
    %692 = vmatpush1.bf16.msra.mxu0 0
    %693 = vmatprep.subr.bf16.mxu0 0
    %694 = vmatpush1.bf16.msra.mxu0 0
    %695 = vmatprep.subr.bf16.mxu0 0
    %696 = vmatpush1.bf16.msra.mxu0 0
    %697 = vmatprep.subr.bf16.mxu0 0
    %698 = vmatpush1.bf16.msra.mxu0 0
    %699 = vmatprep.subr.bf16.mxu0 0
    %700 = vmatpush1.bf16.msra.mxu0 %v681
    %701 = vmatprep.subr.bf16.mxu0 0
    %702 = vmatpush1.bf16.msra.mxu0 %v680
    %703 = vmatprep.subr.bf16.mxu0 0
    %704 = vmatpush2.bf16.msra.mxu0 0
    %705 = vmatprep.subr.bf16.mxu0 0
    %706 = vmatpush2.bf16.msra.mxu0 0
    %707 = vmatprep.subr.bf16.mxu0 0
    %708 = vmatpush2.bf16.msra.mxu0 0
    %709 = vmatprep.subr.bf16.mxu0 0
    %710 = vmatpush2.bf16.msra.mxu0 0
    %711 = vmatprep.subr.bf16.mxu0 0
    %712 = vmatpush2.bf16.msra.mxu0 0
    %713 = vmatprep.subr.bf16.mxu0 0
    %714 = vmatpush2.bf16.msra.mxu0 0
    %715 = vmatprep.subr.bf16.mxu0 0
    %716 = vmatpush2.bf16.msra.mxu0 0
    %717 = vmatprep.subr.bf16.mxu0 0
    %718 = vmatpush2.bf16.msra.mxu0 0
    %719 = vmatprep.mubr.bf16.mxu0 0
    %720 = vmatmul.mubr.bf16.gmra.mxu0 %v685
    %v721 = vpop.f32.mrf.mxu0
    %v722 = vadd.f32 %v671, %v721
    %v723 = vpop.f32.mrf.mxu0
    %v724 = vpop.f32.mrf.mxu0
    %v725 = vadd.f32 %v671, %v724
    %v726 = vpop.f32.mrf.mxu0
    %727 = vdwg.mxu0
    %728 = vst [vmem:[#allocation10] sm:$0xff] %v722
    %729 = vst [vmem:[#allocation10 + $0x8] sm:$0xff] %v725
    // Predicated region
    $region34: #{tpu_custom_call.1} parent=1 // pred_check
      _
    $region35: #{tpu_custom_call.1} parent=1 // pred_check_branch
      %731 = sbr.rel (0) target = $region37
    $region36: #{tpu_custom_call.1} parent=1 // pred_region
      %s733 = ssub.s32 256, 256
      %734 = vsyncadd [#allocation4], %s733
      %s735 = sshll.u32 [#allocation10], 4
      %s736 = int_to_ptr.vmem [resolvable:$true] %s735
      %741 = dma.vmem_to_hbm [thread:$0]  %s736, 256, %s4, [#allocation4], 128, 128, 8
    $region37: #{tpu_custom_call.1} parent=1 // pred_fallthru
      _
    // Predicated region
    $region38: #{tpu_custom_call.1} parent=1 // pred_check
      _
    $region39: #{tpu_custom_call.1} parent=1 // pred_check_branch
      %743 = sbr.rel (0) target = $region41
    $region40: #{tpu_custom_call.1} parent=1 // pred_region
      %744 = dma.done [#allocation4], 256
    $region41: #{tpu_custom_call.1} parent=1 // pred_fallthru
      _
    %745 = vsyncpa [#allocation3], 1
    %746 = vsyncpa [#allocation8], 1
    %747 = vsyncpa [#allocation4], 1
    %748 = vsyncpa [#allocation5], 1

</llo_original>
